<compile_context>
chip_gen: v7x
topology: tpu7x:2x2x1
jax: 0.10.0
libtpu: 0.0.40
codegen_flags: <defaults>
</compile_context>

<pallas_src>
import functools

import jax
import jax.numpy as jnp
from jax import lax
from jax.experimental import pallas as pl
from jax.experimental.pallas import tpu as pltpu


def _round_up(n, m):
    return ((n + m - 1) // m) * m


def _make_kernel(tb, chunk):
    """Kernel over one (feature-major) batch tile of width tb, processed in
    lane sub-chunks of `chunk` columns.  Shapes inside the kernel:
        x_ref  : (In, tb)
        w1_ref : (H, In)   b1_ref : (H, 1)
        w2_ref : (H, H)    b2_ref : (H, 1)
        w3_ref : (O, H)    b3_ref : (O, 1)
        out_ref: (O, tb)
    """
    nchunks = tb // chunk

    def kernel(x_ref, w1_ref, b1_ref, w2_ref, b2_ref, w3_ref, b3_ref, out_ref):
        # Tiny parameters: load into vregs once per grid step.
        w1 = w1_ref[...]
        b1 = b1_ref[...]
        w2 = w2_ref[...]
        b2 = b2_ref[...]
        w3 = w3_ref[...]
        b3 = b3_ref[...]

        def compute(start, size):
            xc = x_ref[:, pl.ds(start, size)]                       # (In, size)
            # fc1 + ReLU : (H, In) @ (In, size) -> (H, size)   (MXU)
            h1 = jnp.dot(w1, xc, preferred_element_type=jnp.float32)
            h1 = jnp.maximum(h1 + b1, 0.0)
            # fc2 + ReLU : (H, H) @ (H, size) -> (H, size)     (MXU)
            h2 = jnp.dot(w2, h1, preferred_element_type=jnp.float32)
            h2 = jnp.maximum(h2 + b2, 0.0)
            # fc3 : (O, H) @ (H, size) -> (O, size), lane-dense output (MXU).
            y = jnp.dot(w3, h2, preferred_element_type=jnp.float32) + b3
            out_ref[:, pl.ds(start, size)] = y.astype(out_ref.dtype)

        if nchunks == 1:
            compute(0, tb)
        elif nchunks <= 8:
            # Few chunks: fully static, unrolled.
            for c in range(nchunks):
                compute(c * chunk, chunk)
        else:
            # Many chunks: in-kernel loop; aligned dynamic lane slices.
            def body(c, carry):
                compute(pl.multiple_of(c * chunk, chunk), chunk)
                return carry

            lax.fori_loop(0, nchunks, body, 0)

    return kernel


def _jnp_forward(x, w1, b1, w2, b2, w3, b3):
    x = x.astype(jnp.float32)
    h1 = jnp.maximum(x @ w1.T + b1, 0.0)
    h2 = jnp.maximum(h1 @ w2.T + b2, 0.0)
    return h2 @ w3.T + b3


@functools.partial(
    jax.jit,
    static_argnames=("block_b", "chunk_b", "min_kernel_batch", "force_kernel",
                     "features_first"))
def value_net_forward(x, w1, b1, w2, b2, w3, b3, *,
                      block_b=131072, chunk_b=1024,
                      min_kernel_batch=1024, force_kernel=False,
                      features_first=False):
    """ValueNet forward.

    x: (B, In) (or (In, B) if features_first=True -- skips the transpose pass).
    Params in PyTorch layout (w: (out, in), b: (out,)).  Returns (B, O) f32.
    """
    if features_first:
        In, B = x.shape
    else:
        B, In = x.shape
    H = w1.shape[0]
    O = w3.shape[0]

    # Small-batch fast path: plain fused XLA GEMMs beat any kernel launch here.
    if B < min_kernel_batch and not force_kernel:
        x_nat = x.T if features_first else x
        return _jnp_forward(x_nat, w1, b1, w2, b2, w3, b3)

    # Layout plumbing: one XLA pass (cast + transpose) unless the caller
    # already provides feature-major data.
    if features_first:
        x_t = x.astype(jnp.float32)                       # (In, B), no copy pass
    else:
        x_t = x.astype(jnp.float32).T                     # (In, B)

    block_b = max(128, (block_b // 128) * 128)
    chunk_b = max(128, (chunk_b // 128) * 128)

    # Batch tile selection.
    if B <= 1024:
        tb = B                                            # single full block
    elif B <= block_b:
        # Split into >=2 steps so "parallel" feeds both v7x TensorCores.
        half = pl.cdiv(B, 2)
        align = chunk_b if half >= chunk_b else 128
        tb = min(block_b, _round_up(half, align))
    else:
        tb = block_b

    # In-kernel lane chunk size (static).
    if tb > chunk_b and tb % chunk_b == 0:
        chunk = chunk_b
    else:
        chunk = tb

    grid = (pl.cdiv(B, tb),)                              # ragged last block OK

    b1c = b1.reshape(H, 1).astype(jnp.float32)
    b2c = b2.reshape(H, 1).astype(jnp.float32)
    b3c = b3.reshape(O, 1).astype(jnp.float32)

    out_t = pl.pallas_call(
        _make_kernel(tb, chunk),
        out_shape=jax.ShapeDtypeStruct((O, B), jnp.float32),
        grid_spec=pltpu.PrefetchScalarGridSpec(
            num_scalar_prefetch=0,
            grid=grid,
            in_specs=[
                pl.BlockSpec((In, tb), lambda i: (0, i)),   # x: tiled over batch
                pl.BlockSpec((H, In), lambda i: (0, 0)),    # params: VMEM-resident
                pl.BlockSpec((H, 1), lambda i: (0, 0)),
                pl.BlockSpec((H, H), lambda i: (0, 0)),
                pl.BlockSpec((H, 1), lambda i: (0, 0)),
                pl.BlockSpec((O, H), lambda i: (0, 0)),
                pl.BlockSpec((O, 1), lambda i: (0, 0)),
            ],
            out_specs=pl.BlockSpec((O, tb), lambda i: (0, i)),  # lane-dense out
        ),
        compiler_params=pltpu.CompilerParams(
            dimension_semantics=("parallel",),   # shard batch across TCs (v7x)
            vmem_limit_bytes=32 << 20,           # > v5e's 16 MiB default, <= 48 MiB v7x cap
        ),
    )(x_t, w1.astype(jnp.float32), b1c,
      w2.astype(jnp.float32), b2c,
      w3.astype(jnp.float32), b3c)

    # For O == 1 this transpose is effectively a free reshape; for O > 1 it is
    # a real (small) transpose pass over the output.
    return out_t.T


def init_linear(key, in_features, out_features):
    """PyTorch nn.Linear default init: U[-1/sqrt(in), 1/sqrt(in)]."""
    kw, kb = jax.random.split(key)
    bound = 1.0 / jnp.sqrt(float(in_features))
    w = jax.random.uniform(kw, (out_features, in_features), jnp.float32,
                           minval=-bound, maxval=bound)
    b = jax.random.uniform(kb, (out_features,), jnp.float32,
                           minval=-bound, maxval=bound)
    return w, b


def reference_forward(x, w1, b1, w2, b2, w3, b3):
    h1 = jnp.maximum(x @ w1.T + b1, 0.0)
    h2 = jnp.maximum(h1 @ w2.T + b2, 0.0)
    return h2 @ w3.T + b3


if __name__ == "__main__":
    input_size, hidden_size, output_size = 4, 32, 1

    key = jax.random.PRNGKey(0)
    kx, k1, k2, k3 = jax.random.split(key, 4)
    w1, b1 = init_linear(k1, input_size, hidden_size)
    w2, b2 = init_linear(k2, hidden_size, hidden_size)
    w3, b3 = init_linear(k3, hidden_size, output_size)

    # 1) Tiny batch forced through the kernel (single full block), both input
    #    layouts (batch-major and feature-major / transpose-free path).
    x_small = jax.random.normal(kx, (8, input_size), jnp.float32)
    out = jax.block_until_ready(
        value_net_forward(x_small, w1, b1, w2, b2, w3, b3, force_kernel=True))
    ref = reference_forward(x_small, w1, b1, w2, b2, w3, b3)
    assert out.shape == (8, output_size)
    assert jnp.allclose(out, ref, atol=1e-4, rtol=1e-4), "mismatch (small batch)"

    out_ff = jax.block_until_ready(
        value_net_forward(x_small.T, w1, b1, w2, b2, w3, b3,
                          force_kernel=True, features_first=True))
    assert jnp.allclose(out_ff, ref, atol=1e-4, rtol=1e-4), "mismatch (feature-major)"

    # 2) Multi-step grid with a ragged last block (no padding copy): 3 steps.
    x_rag = jax.random.normal(jax.random.PRNGKey(1), (300, input_size),
                              jnp.float32)
    out_r = jax.block_until_ready(
        value_net_forward(x_rag, w1, b1, w2, b2, w3, b3, block_b=128,
                          force_kernel=True))
    ref_r = reference_forward(x_rag, w1, b1, w2, b2, w3, b3)
    assert out_r.shape == (300, output_size)
    assert jnp.allclose(out_r, ref_r, atol=1e-4, rtol=1e-4), "mismatch (ragged grid)"

    # 3) Two-step grid with in-kernel lane chunking (tb=2048, chunk=1024).
    x_mid = jax.random.normal(jax.random.PRNGKey(2), (4096, input_size),
                              jnp.float32)
    out_m = jax.block_until_ready(
        value_net_forward(x_mid, w1, b1, w2, b2, w3, b3))
    ref_m = reference_forward(x_mid, w1, b1, w2, b2, w3, b3)
    assert out_m.shape == (4096, output_size)
    assert jnp.allclose(out_m, ref_m, atol=1e-4, rtol=1e-4), "mismatch (chunked)"

    # 4) Small-batch fast path (dispatches to plain XLA, no pallas_call).
    x_fast = jax.random.normal(jax.random.PRNGKey(3), (16, input_size),
                               jnp.float32)
    out_f = jax.block_until_ready(
        value_net_forward(x_fast, w1, b1, w2, b2, w3, b3))
    ref_f = reference_forward(x_fast, w1, b1, w2, b2, w3, b3)
    assert jnp.allclose(out_f, ref_f, atol=1e-4, rtol=1e-4), "mismatch (fast path)"

    print("KERNEL_OK")
</pallas_src>

<mosaic_0001>
module attributes {stable_mosaic.version = 11 : i64} {
  func.func @kernel(%arg0: i32, %arg1: memref<4x8xf32, #tpu.memory_space<vmem>>, %arg2: memref<32x4xf32, #tpu.memory_space<vmem>>, %arg3: memref<32x1xf32, #tpu.memory_space<vmem>>, %arg4: memref<32x32xf32, #tpu.memory_space<vmem>>, %arg5: memref<32x1xf32, #tpu.memory_space<vmem>>, %arg6: memref<1x32xf32, #tpu.memory_space<vmem>>, %arg7: memref<1x1xf32, #tpu.memory_space<vmem>>, %arg8: memref<1x8xf32, #tpu.memory_space<vmem>>) attributes {dimension_semantics = [#tpu.dimension_semantics<parallel>], iteration_bounds = array<i64: 1>, scalar_prefetch = 0 : i64, scratch_operands = 0 : i64, tpu.core_type = #tpu.core_type<tc>, window_params = [{transform_indices = @transform_0, window_bounds = array<i64: 4, 8>}, {pipeline_mode = #tpu.pipeline_mode<synchronous>, transform_indices = @transform_1, window_bounds = array<i64: 32, 4>}, {pipeline_mode = #tpu.pipeline_mode<synchronous>, transform_indices = @transform_2, window_bounds = array<i64: 32, 1>}, {pipeline_mode = #tpu.pipeline_mode<synchronous>, transform_indices = @transform_3, window_bounds = array<i64: 32, 32>}, {pipeline_mode = #tpu.pipeline_mode<synchronous>, transform_indices = @transform_4, window_bounds = array<i64: 32, 1>}, {pipeline_mode = #tpu.pipeline_mode<synchronous>, transform_indices = @transform_5, window_bounds = array<i64: 1, 32>}, {pipeline_mode = #tpu.pipeline_mode<synchronous>, transform_indices = @transform_6, window_bounds = array<i64: 1, 1>}, {transform_indices = @transform_7, window_bounds = array<i64: 1, 8>}]} {
    %c0 = arith.constant 0 : index
    %c0_0 = arith.constant 0 : index
    %0 = vector.load %arg2[%c0, %c0_0] : memref<32x4xf32, #tpu.memory_space<vmem>>, vector<32x4xf32>
    %c0_1 = arith.constant 0 : index
    %c0_2 = arith.constant 0 : index
    %1 = vector.load %arg3[%c0_1, %c0_2] : memref<32x1xf32, #tpu.memory_space<vmem>>, vector<32x1xf32>
    %c0_3 = arith.constant 0 : index
    %c0_4 = arith.constant 0 : index
    %2 = vector.load %arg4[%c0_3, %c0_4] : memref<32x32xf32, #tpu.memory_space<vmem>>, vector<32x32xf32>
    %c0_5 = arith.constant 0 : index
    %c0_6 = arith.constant 0 : index
    %3 = vector.load %arg5[%c0_5, %c0_6] : memref<32x1xf32, #tpu.memory_space<vmem>>, vector<32x1xf32>
    %c0_7 = arith.constant 0 : index
    %c0_8 = arith.constant 0 : index
    %4 = vector.load %arg6[%c0_7, %c0_8] : memref<1x32xf32, #tpu.memory_space<vmem>>, vector<1x32xf32>
    %c0_9 = arith.constant 0 : index
    %c0_10 = arith.constant 0 : index
    %5 = vector.load %arg7[%c0_9, %c0_10] : memref<1x1xf32, #tpu.memory_space<vmem>>, vector<1x1xf32>
    %c0_11 = arith.constant 0 : index
    %c0_12 = arith.constant 0 : index
    %6 = vector.load %arg1[%c0_11, %c0_12] : memref<4x8xf32, #tpu.memory_space<vmem>>, vector<4x8xf32>
    %cst = arith.constant dense<0.000000e+00> : vector<32x8xf32>
    %7 = tpu.matmul %0, %6, %cst {dimension_numbers = #tpu.dot_dimension_numbers<[1], [0], [0], [1], [0, 0, 1, 1], [], []>} : vector<32x4xf32>, vector<4x8xf32>, vector<32x8xf32> -> vector<32x8xf32>
    %8 = vector.broadcast %1 : vector<32x1xf32> to vector<32x8xf32>
    %9 = arith.addf %7, %8 : vector<32x8xf32>
    %cst_13 = arith.constant 0.000000e+00 : f32
    %10 = vector.broadcast %cst_13 : f32 to vector<32x8xf32>
    %11 = arith.maximumf %9, %10 : vector<32x8xf32>
    %cst_14 = arith.constant dense<0.000000e+00> : vector<32x8xf32>
    %12 = tpu.matmul %2, %11, %cst_14 {dimension_numbers = #tpu.dot_dimension_numbers<[1], [0], [0], [1], [0, 0, 1, 1], [], []>} : vector<32x32xf32>, vector<32x8xf32>, vector<32x8xf32> -> vector<32x8xf32>
    %13 = vector.broadcast %3 : vector<32x1xf32> to vector<32x8xf32>
    %14 = arith.addf %12, %13 : vector<32x8xf32>
    %cst_15 = arith.constant 0.000000e+00 : f32
    %15 = vector.broadcast %cst_15 : f32 to vector<32x8xf32>
    %16 = arith.maximumf %14, %15 : vector<32x8xf32>
    %cst_16 = arith.constant dense<0.000000e+00> : vector<1x8xf32>
    %17 = tpu.matmul %4, %16, %cst_16 {dimension_numbers = #tpu.dot_dimension_numbers<[1], [0], [0], [1], [0, 0, 1, 1], [], []>} : vector<1x32xf32>, vector<32x8xf32>, vector<1x8xf32> -> vector<1x8xf32>
    %18 = vector.broadcast %5 : vector<1x1xf32> to vector<1x8xf32>
    %19 = arith.addf %17, %18 : vector<1x8xf32>
    %c0_17 = arith.constant 0 : index
    %c0_18 = arith.constant 0 : index
    %20 = vector.load %arg8[%c0_17, %c0_18] : memref<1x8xf32, #tpu.memory_space<vmem>>, vector<1x8xf32>
    tpu.vector_store %arg8[%c0_17, %c0_18], %19 {strides = array<i32>} : memref<1x8xf32, #tpu.memory_space<vmem>>, vector<1x8xf32>,
    return
  }
  func.func @transform_0(%arg0: i32) -> (i32, i32) {
    %c0_i32 = arith.constant 0 : i32
    %c0_i32_0 = arith.constant 0 : i32
    return %c0_i32, %arg0 : i32, i32
  }
  func.func @transform_1(%arg0: i32) -> (i32, i32) {
    %c0_i32 = arith.constant 0 : i32
    %c0_i32_0 = arith.constant 0 : i32
    %c0_i32_1 = arith.constant 0 : i32
    return %c0_i32, %c0_i32_0 : i32, i32
  }
  func.func @transform_2(%arg0: i32) -> (i32, i32) {
    %c0_i32 = arith.constant 0 : i32
    %c0_i32_0 = arith.constant 0 : i32
    %c0_i32_1 = arith.constant 0 : i32
    return %c0_i32, %c0_i32_0 : i32, i32
  }
  func.func @transform_3(%arg0: i32) -> (i32, i32) {
    %c0_i32 = arith.constant 0 : i32
    %c0_i32_0 = arith.constant 0 : i32
    %c0_i32_1 = arith.constant 0 : i32
    return %c0_i32, %c0_i32_0 : i32, i32
  }
  func.func @transform_4(%arg0: i32) -> (i32, i32) {
    %c0_i32 = arith.constant 0 : i32
    %c0_i32_0 = arith.constant 0 : i32
    %c0_i32_1 = arith.constant 0 : i32
    return %c0_i32, %c0_i32_0 : i32, i32
  }
  func.func @transform_5(%arg0: i32) -> (i32, i32) {
    %c0_i32 = arith.constant 0 : i32
    %c0_i32_0 = arith.constant 0 : i32
    %c0_i32_1 = arith.constant 0 : i32
    return %c0_i32, %c0_i32_0 : i32, i32
  }
  func.func @transform_6(%arg0: i32) -> (i32, i32) {
    %c0_i32 = arith.constant 0 : i32
    %c0_i32_0 = arith.constant 0 : i32
    %c0_i32_1 = arith.constant 0 : i32
    return %c0_i32, %c0_i32_0 : i32, i32
  }
  func.func @transform_7(%arg0: i32) -> (i32, i32) {
    %c0_i32 = arith.constant 0 : i32
    %c0_i32_0 = arith.constant 0 : i32
    return %c0_i32, %arg0 : i32, i32
  }
}

</mosaic_0001>

<llo_original>
// kernel: value_net_forward.1
$region0: #{value_net_forward.1}
  #allocation0 [shape = 'u32[]', space=smem, size = 0x4, offset = 0x4, fixed_abs, tag = 'smem constant byte address 0x4 - core index']
  #allocation1 [shape = 'u32[144,128]{1,0:T(1,128)}', space=vmem, size = 0x12000, scoped, tag = 'internal scratch']
  #allocation2 [shape = 'f32[1,1]{1,0:T(1,128)S(1)}', space=vmem, size = 0x200, scoped, tag = 'scoped memory for value_net_forward.1']
  %s0 = inlined_call_operand.vmem [shape: f32[4,8], index: 0, kind: input, shape index: {}]
  %s1 = inlined_call_operand.vmem [shape: f32[32,4], index: 1, kind: input, shape index: {}]
  %s2 = inlined_call_operand.vmem [shape: f32[32,1], index: 2, kind: input, shape index: {}]
  %s3 = inlined_call_operand.vmem [shape: f32[32,32], index: 3, kind: input, shape index: {}]
  %s4 = inlined_call_operand.vmem [shape: f32[32,1], index: 4, kind: input, shape index: {}]
  %s5 = inlined_call_operand.vmem [shape: f32[1,32], index: 5, kind: input, shape index: {}]
  %s6 = inlined_call_operand.<no memory space> [shape: f32[1,1], index: 6, kind: input, shape index: {}]
  %s7 = inlined_call_operand.hbm [shape: f32[1,8], index: 7, kind: output, shape index: {}]
  %s8 = sld [smem:[#allocation0]]
  $region38: #{value_net_forward.1} parent=0
    _
  %s10 = ssub.s32 1, %s8
  %s11 = scalar_select 0, %s10, %s8
  %v12 = vstv %s6
  %13 = vst [vmem:[#allocation2] sm:$0x1] %v12
  $region1: #{value_net_forward.1} parent=0
    #allocation3 [shape = 'u8[512]{0}', space=vmem, size = 0x400, scoped, tag = 'output window, operand 0, single buffered']
    #allocation4 [shape = 's32[1]{0}', space=sflag, size = 0x4, scoped, tag = 'scoped memory for value_net_forward.1']
    %14 = vsyncpa [#allocation4], 0
    // Predicated region
    $region2: #{value_net_forward.1} parent=1 // pred_check
      _
    $region3: #{value_net_forward.1} parent=1 // pred_check_branch
      %16 = sbr.rel (0) target = $region5
    $region4: #{value_net_forward.1} parent=1 // pred_region
      _
    $region5: #{value_net_forward.1} parent=1 // pred_fallthru
      _
    // Predicated region
    $region6: #{value_net_forward.1} parent=1 // pred_check
      _
    $region7: #{value_net_forward.1} parent=1 // pred_check_branch
      %18 = sbr.rel (0) target = $region9
    $region8: #{value_net_forward.1} parent=1 // pred_region
      _
    $region9: #{value_net_forward.1} parent=1 // pred_fallthru
      _
    // Predicated region
    $region10: #{value_net_forward.1} parent=1 // pred_check
      _
    $region11: #{value_net_forward.1} parent=1 // pred_check_branch
      %20 = sbr.rel (0) target = $region13
    $region12: #{value_net_forward.1} parent=1 // pred_region
      _
    $region13: #{value_net_forward.1} parent=1 // pred_fallthru
      _
    // Predicated region
    $region14: #{value_net_forward.1} parent=1 // pred_check
      _
    $region15: #{value_net_forward.1} parent=1 // pred_check_branch
      %22 = sbr.rel (0) target = $region17
    $region16: #{value_net_forward.1} parent=1 // pred_region
      _
    $region17: #{value_net_forward.1} parent=1 // pred_fallthru
      _
    // Predicated region
    $region18: #{value_net_forward.1} parent=1 // pred_check
      _
    $region19: #{value_net_forward.1} parent=1 // pred_check_branch
      %24 = sbr.rel (0) target = $region21
    $region20: #{value_net_forward.1} parent=1 // pred_region
      _
    $region21: #{value_net_forward.1} parent=1 // pred_fallthru
      _
    // Predicated region
    $region22: #{value_net_forward.1} parent=1 // pred_check
      _
    $region23: #{value_net_forward.1} parent=1 // pred_check_branch
      %26 = sbr.rel (0) target = $region25
    $region24: #{value_net_forward.1} parent=1 // pred_region
      _
    $region25: #{value_net_forward.1} parent=1 // pred_fallthru
      _
    // Predicated region
    $region26: #{value_net_forward.1} parent=1 // pred_check
      _
    $region27: #{value_net_forward.1} parent=1 // pred_check_branch
      %28 = sbr.rel (0) target = $region29
    $region28: #{value_net_forward.1} parent=1 // pred_region
      _
    $region29: #{value_net_forward.1} parent=1 // pred_fallthru
      _
    %v29 = vld [vmem:[%s1] sm:$0xff]
    %v30 = vld [vmem:[%s1 + $0x8] sm:$0xff]
    %v31 = vld [vmem:[%s1 + $0x10] sm:$0xff]
    %v32 = vld [vmem:[%s1 + $0x18] sm:$0xff]
    %v33 = vld [vmem:[%s2] sm:$0xff]
    %v34 = vld [vmem:[%s2 + $0x8] sm:$0xff]
    %v35 = vld [vmem:[%s2 + $0x10] sm:$0xff]
    %v36 = vld [vmem:[%s2 + $0x18] sm:$0xff]
    %v37 = vld [vmem:[%s3] sm:$0xff]
    %v38 = vld [vmem:[%s3 + $0x8] sm:$0xff]
    %v39 = vld [vmem:[%s3 + $0x10] sm:$0xff]
    %v40 = vld [vmem:[%s3 + $0x18] sm:$0xff]
    %v41 = vld [vmem:[%s4] sm:$0xff]
    %v42 = vld [vmem:[%s4 + $0x8] sm:$0xff]
    %v43 = vld [vmem:[%s4 + $0x10] sm:$0xff]
    %v44 = vld [vmem:[%s4 + $0x18] sm:$0xff]
    %v45 = vld [vmem:[%s5] sm:$0x1]
    %v46 = vld [vmem:[#allocation2] sm:$0x1]
    %v47 = vld [vmem:[%s0] sm:$0xf]
    %49 = vset.pattern.permute.xlu0 0
    %50 = vperm.xlu0 %49, %v33
    %v51 = vpop.permute.xlu0 %50
    %54 = vset.pattern.permute.xlu0 0
    %55 = vperm.xlu0 %54, %v34
    %v56 = vpop.permute.xlu0 %55
    %59 = vset.pattern.permute.xlu0 0
    %60 = vperm.xlu0 %59, %v35
    %v61 = vpop.permute.xlu0 %60
    %64 = vset.pattern.permute.xlu0 0
    %65 = vperm.xlu0 %64, %v36
    %v66 = vpop.permute.xlu0 %65
    %vm68 = vcmask 31744
    %v70 = vsel %vm68, %v29, 0
    %v73 = vsel %vm68, %v30, 0
    %v76 = vsel %vm68, %v31, 0
    %v79 = vsel %vm68, %v32, 0
    %vm81 = vcmask 1043456
    %v83 = vsel %vm81, %v47, 0
    %85 = vmatprep.subr.mxu0 0.0
    %86 = vmatpush1.msra.mxu0 %v83
    %87 = vmatprep.subr.mxu0 0.0
    %88 = vmatpush1.msra.mxu0 0.0
    %89 = vmatprep.subr.mxu0 0.0
    %90 = vmatpush1.msra.mxu0 0.0
    %91 = vmatprep.subr.mxu0 0.0
    %92 = vmatpush1.msra.mxu0 0.0
    %93 = vmatprep.subr.mxu0 0.0
    %94 = vmatpush1.msra.mxu0 0.0
    %95 = vmatprep.subr.mxu0 0.0
    %96 = vmatpush1.msra.mxu0 0.0
    %97 = vmatprep.subr.mxu0 0.0
    %98 = vmatpush1.msra.mxu0 0.0
    %99 = vmatprep.subr.mxu0 0.0
    %100 = vmatpush1.msra.mxu0 0.0
    %101 = vmatprep.subr.mxu0 0.0
    %102 = vmatpush1.msra.mxu0 0.0
    %103 = vmatprep.subr.mxu0 0.0
    %104 = vmatpush1.msra.mxu0 0.0
    %105 = vmatprep.subr.mxu0 0.0
    %106 = vmatpush1.msra.mxu0 0.0
    %107 = vmatprep.subr.mxu0 0.0
    %108 = vmatpush1.msra.mxu0 0.0
    %109 = vmatprep.subr.mxu0 0.0
    %110 = vmatpush1.msra.mxu0 0.0
    %111 = vmatprep.subr.mxu0 0.0
    %112 = vmatpush1.msra.mxu0 0.0
    %113 = vmatprep.subr.mxu0 0.0
    %114 = vmatpush1.msra.mxu0 0.0
    %115 = vmatprep.subr.mxu0 0.0
    %116 = vmatpush1.msra.mxu0 0.0
    %117 = vmatprep.subr.mxu0 0.0
    %118 = vmatpush1.msra.mxu0 0.0
    %119 = vmatprep.subr.mxu0 0.0
    %120 = vmatpush1.msra.mxu0 0.0
    %121 = vmatprep.subr.mxu0 0.0
    %122 = vmatpush1.msra.mxu0 0.0
    %123 = vmatprep.subr.mxu0 0.0
    %124 = vmatpush1.msra.mxu0 0.0
    %125 = vmatprep.subr.mxu0 0.0
    %126 = vmatpush1.msra.mxu0 0.0
    %127 = vmatprep.subr.mxu0 0.0
    %128 = vmatpush1.msra.mxu0 0.0
    %129 = vmatprep.subr.mxu0 0.0
    %130 = vmatpush1.msra.mxu0 0.0
    %131 = vmatprep.subr.mxu0 0.0
    %132 = vmatpush1.msra.mxu0 0.0
    %133 = vmatprep.subr.mxu0 0.0
    %134 = vmatpush1.msra.mxu0 0.0
    %135 = vmatprep.subr.mxu0 0.0
    %136 = vmatpush1.msra.mxu0 0.0
    %137 = vmatprep.subr.mxu0 0.0
    %138 = vmatpush1.msra.mxu0 0.0
    %139 = vmatprep.subr.mxu0 0.0
    %140 = vmatpush1.msra.mxu0 0.0
    %141 = vmatprep.subr.mxu0 0.0
    %142 = vmatpush1.msra.mxu0 0.0
    %143 = vmatprep.subr.mxu0 0.0
    %144 = vmatpush1.msra.mxu0 0.0
    %145 = vmatprep.subr.mxu0 0.0
    %146 = vmatpush1.msra.mxu0 0.0
    %147 = vmatprep.subr.mxu0 0.0
    %148 = vmatpush1.msra.mxu0 0.0
    %149 = vmatprep.mubr.f32.mxu0 0.0
    %150 = vmatmul.mubr.f32.gmra.mrb[0].mxu0 %v70
    %v151 = vpop.f32.mrb[0].mxu0
    %v152 = vadd.f32 %v51, %v151
    %v153 = vpop.f32.mrb[0].mxu0
    %154 = vmatprep.mubr.f32.mxu0 0.0
    %155 = vmatmul.mubr.f32.gmra.mrb[0].mxu0 %v73
    %v156 = vpop.f32.mrb[0].mxu0
    %v157 = vadd.f32 %v56, %v156
    %v158 = vpop.f32.mrb[0].mxu0
    %159 = vmatprep.mubr.f32.mxu0 0.0
    %160 = vmatmul.mubr.f32.gmra.mrb[0].mxu0 %v76
    %v161 = vpop.f32.mrb[0].mxu0
    %v162 = vadd.f32 %v61, %v161
    %v163 = vpop.f32.mrb[0].mxu0
    %164 = vmatprep.mubr.f32.mxu0 0.0
    %165 = vmatmul.mubr.f32.gmra.mrb[0].mxu0 %v79
    %v166 = vpop.f32.mrb[0].mxu0
    %v167 = vadd.f32 %v66, %v166
    %v168 = vpop.f32.mrb[0].mxu0
    %169 = vdwg.mxu0
    %v170 = vmax.f32 %v152, 0.0
    %v171 = vmax.f32 %v157, 0.0
    %v172 = vmax.f32 %v162, 0.0
    %v173 = vmax.f32 %v167, 0.0
    %175 = vset.pattern.permute.xlu0 0
    %176 = vperm.xlu0 %175, %v41
    %v177 = vpop.permute.xlu0 %176
    %180 = vset.pattern.permute.xlu0 0
    %181 = vperm.xlu0 %180, %v42
    %v182 = vpop.permute.xlu0 %181
    %185 = vset.pattern.permute.xlu0 0
    %186 = vperm.xlu0 %185, %v43
    %v187 = vpop.permute.xlu0 %186
    %190 = vset.pattern.permute.xlu0 0
    %191 = vperm.xlu0 %190, %v44
    %v192 = vpop.permute.xlu0 %191
    %vm194 = vcmask 261120
    %v196 = vsel %vm194, %v37, 0
    %v199 = vsel %vm194, %v38, 0
    %v202 = vsel %vm194, %v39, 0
    %v205 = vsel %vm194, %v40, 0
    %207 = vmatprep.subr.mxu0 0.0
    %208 = vmatpush1.msra.mxu0 %v170
    %209 = vmatprep.subr.mxu0 0.0
    %210 = vmatpush1.msra.mxu0 %v171
    %211 = vmatprep.subr.mxu0 0.0
    %212 = vmatpush1.msra.mxu0 %v172
    %213 = vmatprep.subr.mxu0 0.0
    %214 = vmatpush1.msra.mxu0 %v173
    %215 = vmatprep.subr.mxu0 0.0
    %216 = vmatpush1.msra.mxu0 0.0
    %217 = vmatprep.subr.mxu0 0.0
    %218 = vmatpush1.msra.mxu0 0.0
    %219 = vmatprep.subr.mxu0 0.0
    %220 = vmatpush1.msra.mxu0 0.0
    %221 = vmatprep.subr.mxu0 0.0
    %222 = vmatpush1.msra.mxu0 0.0
    %223 = vmatprep.subr.mxu0 0.0
    %224 = vmatpush1.msra.mxu0 0.0
    %225 = vmatprep.subr.mxu0 0.0
    %226 = vmatpush1.msra.mxu0 0.0
    %227 = vmatprep.subr.mxu0 0.0
    %228 = vmatpush1.msra.mxu0 0.0
    %229 = vmatprep.subr.mxu0 0.0
    %230 = vmatpush1.msra.mxu0 0.0
    %231 = vmatprep.subr.mxu0 0.0
    %232 = vmatpush1.msra.mxu0 0.0
    %233 = vmatprep.subr.mxu0 0.0
    %234 = vmatpush1.msra.mxu0 0.0
    %235 = vmatprep.subr.mxu0 0.0
    %236 = vmatpush1.msra.mxu0 0.0
    %237 = vmatprep.subr.mxu0 0.0
    %238 = vmatpush1.msra.mxu0 0.0
    %239 = vmatprep.subr.mxu0 0.0
    %240 = vmatpush1.msra.mxu0 0.0
    %241 = vmatprep.subr.mxu0 0.0
    %242 = vmatpush1.msra.mxu0 0.0
    %243 = vmatprep.subr.mxu0 0.0
    %244 = vmatpush1.msra.mxu0 0.0
    %245 = vmatprep.subr.mxu0 0.0
    %246 = vmatpush1.msra.mxu0 0.0
    %247 = vmatprep.subr.mxu0 0.0
    %248 = vmatpush1.msra.mxu0 0.0
    %249 = vmatprep.subr.mxu0 0.0
    %250 = vmatpush1.msra.mxu0 0.0
    %251 = vmatprep.subr.mxu0 0.0
    %252 = vmatpush1.msra.mxu0 0.0
    %253 = vmatprep.subr.mxu0 0.0
    %254 = vmatpush1.msra.mxu0 0.0
    %255 = vmatprep.subr.mxu0 0.0
    %256 = vmatpush1.msra.mxu0 0.0
    %257 = vmatprep.subr.mxu0 0.0
    %258 = vmatpush1.msra.mxu0 0.0
    %259 = vmatprep.subr.mxu0 0.0
    %260 = vmatpush1.msra.mxu0 0.0
    %261 = vmatprep.subr.mxu0 0.0
    %262 = vmatpush1.msra.mxu0 0.0
    %263 = vmatprep.subr.mxu0 0.0
    %264 = vmatpush1.msra.mxu0 0.0
    %265 = vmatprep.subr.mxu0 0.0
    %266 = vmatpush1.msra.mxu0 0.0
    %267 = vmatprep.subr.mxu0 0.0
    %268 = vmatpush1.msra.mxu0 0.0
    %269 = vmatprep.subr.mxu0 0.0
    %270 = vmatpush1.msra.mxu0 0.0
    %271 = vmatprep.mubr.f32.mxu0 0.0
    %272 = vmatmul.mubr.f32.gmra.mrb[0].mxu0 %v196
    %v273 = vpop.f32.mrb[0].mxu0
    %v274 = vadd.f32 %v177, %v273
    %v275 = vpop.f32.mrb[0].mxu0
    %276 = vmatprep.mubr.f32.mxu0 0.0
    %277 = vmatmul.mubr.f32.gmra.mrb[0].mxu0 %v199
    %v278 = vpop.f32.mrb[0].mxu0
    %v279 = vadd.f32 %v182, %v278
    %v280 = vpop.f32.mrb[0].mxu0
    %281 = vmatprep.mubr.f32.mxu0 0.0
    %282 = vmatmul.mubr.f32.gmra.mrb[0].mxu0 %v202
    %v283 = vpop.f32.mrb[0].mxu0
    %v284 = vadd.f32 %v187, %v283
    %v285 = vpop.f32.mrb[0].mxu0
    %286 = vmatprep.mubr.f32.mxu0 0.0
    %287 = vmatmul.mubr.f32.gmra.mrb[0].mxu0 %v205
    %v288 = vpop.f32.mrb[0].mxu0
    %v289 = vadd.f32 %v192, %v288
    %v290 = vpop.f32.mrb[0].mxu0
    %291 = vdwg.mxu0
    %v292 = vmax.f32 %v274, 0.0
    %v293 = vmax.f32 %v279, 0.0
    %v294 = vmax.f32 %v284, 0.0
    %v295 = vmax.f32 %v289, 0.0
    %297 = vset.pattern.permute.xlu0 0
    %298 = vperm.xlu0 %297, %v46
    %v299 = vpop.permute.xlu0 %298
    %v301 = vlaneseq
    %v302 = vshrl.u32 %v301, 7
    %v303 = vsub.s32 0, %v302
    %v304 = vrot.slane %v299, %v303
    %v306 = vsel %vm194, %v45, 0
    %308 = vmatprep.subr.mxu0 0.0
    %309 = vmatpush1.msra.mxu0 %v292
    %310 = vmatprep.subr.mxu0 0.0
    %311 = vmatpush1.msra.mxu0 %v293
    %312 = vmatprep.subr.mxu0 0.0
    %313 = vmatpush1.msra.mxu0 %v294
    %314 = vmatprep.subr.mxu0 0.0
    %315 = vmatpush1.msra.mxu0 %v295
    %316 = vmatprep.subr.mxu0 0.0
    %317 = vmatpush1.msra.mxu0 0.0
    %318 = vmatprep.subr.mxu0 0.0
    %319 = vmatpush1.msra.mxu0 0.0
    %320 = vmatprep.subr.mxu0 0.0
    %321 = vmatpush1.msra.mxu0 0.0
    %322 = vmatprep.subr.mxu0 0.0
    %323 = vmatpush1.msra.mxu0 0.0
    %324 = vmatprep.subr.mxu0 0.0
    %325 = vmatpush1.msra.mxu0 0.0
    %326 = vmatprep.subr.mxu0 0.0
    %327 = vmatpush1.msra.mxu0 0.0
    %328 = vmatprep.subr.mxu0 0.0
    %329 = vmatpush1.msra.mxu0 0.0
    %330 = vmatprep.subr.mxu0 0.0
    %331 = vmatpush1.msra.mxu0 0.0
    %332 = vmatprep.subr.mxu0 0.0
    %333 = vmatpush1.msra.mxu0 0.0
    %334 = vmatprep.subr.mxu0 0.0
    %335 = vmatpush1.msra.mxu0 0.0
    %336 = vmatprep.subr.mxu0 0.0
    %337 = vmatpush1.msra.mxu0 0.0
    %338 = vmatprep.subr.mxu0 0.0
    %339 = vmatpush1.msra.mxu0 0.0
    %340 = vmatprep.subr.mxu0 0.0
    %341 = vmatpush1.msra.mxu0 0.0
    %342 = vmatprep.subr.mxu0 0.0
    %343 = vmatpush1.msra.mxu0 0.0
    %344 = vmatprep.subr.mxu0 0.0
    %345 = vmatpush1.msra.mxu0 0.0
    %346 = vmatprep.subr.mxu0 0.0
    %347 = vmatpush1.msra.mxu0 0.0
    %348 = vmatprep.subr.mxu0 0.0
    %349 = vmatpush1.msra.mxu0 0.0
    %350 = vmatprep.subr.mxu0 0.0
    %351 = vmatpush1.msra.mxu0 0.0
    %352 = vmatprep.subr.mxu0 0.0
    %353 = vmatpush1.msra.mxu0 0.0
    %354 = vmatprep.subr.mxu0 0.0
    %355 = vmatpush1.msra.mxu0 0.0
    %356 = vmatprep.subr.mxu0 0.0
    %357 = vmatpush1.msra.mxu0 0.0
    %358 = vmatprep.subr.mxu0 0.0
    %359 = vmatpush1.msra.mxu0 0.0
    %360 = vmatprep.subr.mxu0 0.0
    %361 = vmatpush1.msra.mxu0 0.0
    %362 = vmatprep.subr.mxu0 0.0
    %363 = vmatpush1.msra.mxu0 0.0
    %364 = vmatprep.subr.mxu0 0.0
    %365 = vmatpush1.msra.mxu0 0.0
    %366 = vmatprep.subr.mxu0 0.0
    %367 = vmatpush1.msra.mxu0 0.0
    %368 = vmatprep.subr.mxu0 0.0
    %369 = vmatpush1.msra.mxu0 0.0
    %370 = vmatprep.subr.mxu0 0.0
    %371 = vmatpush1.msra.mxu0 0.0
    %372 = vmatprep.mubr.f32.mxu0 0.0
    %373 = vmatmul.mubr.f32.gmra.mrb[0].mxu0 %v306
    %v374 = vpop.f32.mrb[0].mxu0
    %v375 = vadd.f32 %v304, %v374
    %v376 = vpop.f32.mrb[0].mxu0
    %377 = vdwg.mxu0
    %vm378 = vcmask 57344
    %379 = vst.msk [vmem:[#allocation3] sm:$0x1] %vm378, %v375
    // Predicated region
    $region30: #{value_net_forward.1} parent=1 // pred_check
      _
    $region31: #{value_net_forward.1} parent=1 // pred_check_branch
      %381 = sbr.rel (0) target = $region33
    $region32: #{value_net_forward.1} parent=1 // pred_region
      %s383 = ssub.s32 16, 16
      %384 = vsyncadd [#allocation4], %s383
      %s386 = sshll.u32 [#allocation3], 4
      %s387 = int_to_ptr.vmem [resolvable:$true] %s386
      %389 = dma.vmem_to_hbm [thread:$0]  %s387, 16, %s7, [#allocation4]
    $region33: #{value_net_forward.1} parent=1 // pred_fallthru
      _
    // Predicated region
    $region34: #{value_net_forward.1} parent=1 // pred_check
      _
    $region35: #{value_net_forward.1} parent=1 // pred_check_branch
      %391 = sbr.rel (0) target = $region37
    $region36: #{value_net_forward.1} parent=1 // pred_region
      %392 = dma.done [#allocation4], 16
    $region37: #{value_net_forward.1} parent=1 // pred_fallthru
      _
    %393 = vsyncpa [#allocation4], 1

</llo_original>
